<compile_context>
chip_gen: v6e
topology: v6e:2x2x1
jax: 0.10.0
libtpu: 0.0.40
codegen_flags: <defaults>
</compile_context>

<pallas_src>
import jax
import jax.numpy as jnp
from jax.experimental import pallas as pl
from jax.experimental.pallas import tpu as pltpu


def mlp_kernel(x_ref, w1_ref, b1_ref, w2_ref, b2_ref, o_ref):
    # x_ref: (5, 1, 8, L) VMEM block, o_ref: (1, 8, L) VMEM block.
    # w1_ref: (15,) SMEM, row-major flatten of W1 (5, 3) as used in x @ W1
    #         (NOTE: a raw torch.nn.Linear.weight is (out,in)=(3,5) and must be
    #          transposed before flattening).
    # b1_ref: (3,), w2_ref: (3,), b2_ref: (1,) SMEM scalars.
    xs = [x_ref[k, 0] for k in range(5)]          # five dense (8, L) slabs

    y = None
    for j in range(3):
        # h_j = sigmoid( sum_k W1[k, j] * x_k + b1[j] )   -- VPU FMAs + EUP
        acc = w1_ref[j] * xs[0]                    # k = 0 term (w1_ref[0*3+j])
        for k in range(1, 5):
            acc = acc + w1_ref[k * 3 + j] * xs[k]
        h_j = jax.nn.sigmoid(acc + b1_ref[j])
        # Layer 2 fused: y += W2[j] * h_j  (only one hidden slab live at a time)
        term = w2_ref[j] * h_j
        y = term if y is None else y + term

    o_ref[0] = jax.nn.sigmoid(y + b2_ref[0])       # dense (8, L) unmasked store


def _round_up(a, m):
    return ((a + m - 1) // m) * m


def mlp_forward(x, w1, b1, w2, b2, *, tile_n_max=65536):
    """x: (N, 5) f32. Returns (N, 1) f32, matching the PyTorch module output."""
    n = x.shape[0]

    # Lane-tile selection: multiple of 1024 (so tile_n//8 is a multiple of 128),
    # large enough to amortize per-step overhead, and >=2 grid steps when the
    # batch is big enough so v7x can shard across its two TensorCores.
    if n > 1024:
        target = _round_up((n + 1) // 2, 1024)
    else:
        target = 1024
    tile_n = max(1024, min(tile_n_max, target))
    sub_l = tile_n // 8                                  # lanes per sublane row

    n_pad = _round_up(n, tile_n)
    num_tiles = n_pad // tile_n

    # Pad the small (N, 5) input (not the big transposed buffer), then build the
    # sublane/lane-dense 4-D view.  transpose+reshape is one contiguous copy.
    # TODO(synk): accept x already in feature-major (5, N) layout upstream to
    # drop this transpose pass entirely (it is pure HBM traffic).
    if n_pad != n:
        x = jnp.pad(x, ((0, n_pad - n), (0, 0)))
    xt4 = jnp.transpose(x).reshape(5, num_tiles, 8, sub_l)

    w1_flat = jnp.asarray(w1, jnp.float32).reshape(-1)   # (15,) row-major (5,3)
    b1_flat = jnp.asarray(b1, jnp.float32).reshape(-1)   # (3,)
    w2_flat = jnp.asarray(w2, jnp.float32).reshape(-1)   # (3,)
    b2_flat = jnp.asarray(b2, jnp.float32).reshape(-1)   # (1,)

    out4 = pl.pallas_call(
        mlp_kernel,
        out_shape=jax.ShapeDtypeStruct((num_tiles, 8, sub_l), jnp.float32),
        grid_spec=pltpu.PrefetchScalarGridSpec(
            num_scalar_prefetch=0,
            grid=(num_tiles,),
            in_specs=[
                pl.BlockSpec((5, 1, 8, sub_l), lambda i: (0, i, 0, 0)),   # x tile
                pl.BlockSpec(memory_space=pltpu.MemorySpace.SMEM),        # w1
                pl.BlockSpec(memory_space=pltpu.MemorySpace.SMEM),        # b1
                pl.BlockSpec(memory_space=pltpu.MemorySpace.SMEM),        # w2
                pl.BlockSpec(memory_space=pltpu.MemorySpace.SMEM),        # b2
            ],
            out_specs=pl.BlockSpec((1, 8, sub_l), lambda i: (i, 0, 0)),
        ),
        compiler_params=pltpu.CompilerParams(
            dimension_semantics=("parallel",),            # megacore sharding
            vmem_limit_bytes=32 * 1024 * 1024,            # headroom for big tiles
        ),
        cost_estimate=pl.CostEstimate(
            flops=36 * n_pad,
            transcendentals=4 * n_pad,
            bytes_accessed=24 * n_pad,
        ),
    )(xt4, w1_flat, b1_flat, w2_flat, b2_flat)

    # (num_tiles, 8, L) flattens back to padded batch order; drop the pad lanes.
    return out4.reshape(n_pad)[:n].reshape(n, 1)


def mlp_reference(x, w1, b1, w2, b2):
    h = jax.nn.sigmoid(x @ w1 + b1)
    return jax.nn.sigmoid(h @ w2 + b2)


if __name__ == "__main__":
    key = jax.random.PRNGKey(0)
    k_x, k_w1, k_b1, k_w2, k_b2 = jax.random.split(key, 5)

    # Titanic-like batch: N rows x 5 one-hot/ordinal features.  N deliberately
    # not a multiple of the tile to exercise the padding / partial-tile path.
    n = 777
    x = jax.random.uniform(k_x, (n, 5), jnp.float32, minval=0.0, maxval=3.0)

    # torch.nn.Linear-style init: U[-1/sqrt(fan_in), +1/sqrt(fan_in)], stored in
    # the x @ W convention (a raw Linear.weight would need a transpose).
    bound1 = 1.0 / jnp.sqrt(5.0)
    w1 = jax.random.uniform(k_w1, (5, 3), jnp.float32, -bound1, bound1)
    b1 = jax.random.uniform(k_b1, (3,), jnp.float32, -bound1, bound1)
    bound2 = 1.0 / jnp.sqrt(3.0)
    w2 = jax.random.uniform(k_w2, (3, 1), jnp.float32, -bound2, bound2)
    b2 = jax.random.uniform(k_b2, (1,), jnp.float32, -bound2, bound2)

    out = mlp_forward(x, w1, b1, w2, b2)
    out = jax.block_until_ready(out)

    ref = mlp_reference(x, w1, b1, w2, b2)
    assert out.shape == (n, 1)
    assert jnp.allclose(out, ref, atol=1e-5, rtol=1e-5)

    # Mirror Model.test() thresholding (host-side glue, not the hot path).
    preds = (out[:, 0] > 0.5).astype(jnp.int32)
    _ = jax.block_until_ready(preds)

    print("KERNEL_OK")
</pallas_src>

<mosaic_0001>
module attributes {stable_mosaic.version = 11 : i64} {
  func.func @mlp_kernel(%arg0: i32, %arg1: memref<5x1x8x128xf32, #tpu.memory_space<vmem>>, %arg2: memref<15xf32, #tpu.memory_space<smem>>, %arg3: memref<3xf32, #tpu.memory_space<smem>>, %arg4: memref<3xf32, #tpu.memory_space<smem>>, %arg5: memref<1xf32, #tpu.memory_space<smem>>, %arg6: memref<1x8x128xf32, #tpu.memory_space<vmem>>) attributes {dimension_semantics = [#tpu.dimension_semantics<parallel>], iteration_bounds = array<i64: 1>, scalar_prefetch = 0 : i64, scratch_operands = 0 : i64, tpu.core_type = #tpu.core_type<tc>, window_params = [{transform_indices = @transform_0, window_bounds = array<i64: 5, 1, 8, 128>}, {transform_indices = @transform_1, window_bounds = array<i64: 15>}, {transform_indices = @transform_2, window_bounds = array<i64: 3>}, {transform_indices = @transform_3, window_bounds = array<i64: 3>}, {transform_indices = @transform_4, window_bounds = array<i64: 1>}, {transform_indices = @transform_5, window_bounds = array<i64: 1, 8, 128>}]} {
    %c0 = arith.constant 0 : index
    %c0_0 = arith.constant 0 : index
    %c0_1 = arith.constant 0 : index
    %c0_2 = arith.constant 0 : index
    %0 = vector.load %arg1[%c0, %c0_0, %c0_1, %c0_2] : memref<5x1x8x128xf32, #tpu.memory_space<vmem>>, vector<1x1x8x128xf32>
    %1 = vector.shape_cast %0 : vector<1x1x8x128xf32> to vector<8x128xf32>
    %c1 = arith.constant 1 : index
    %c0_3 = arith.constant 0 : index
    %c0_4 = arith.constant 0 : index
    %c0_5 = arith.constant 0 : index
    %2 = vector.load %arg1[%c1, %c0_3, %c0_4, %c0_5] : memref<5x1x8x128xf32, #tpu.memory_space<vmem>>, vector<1x1x8x128xf32>
    %3 = vector.shape_cast %2 : vector<1x1x8x128xf32> to vector<8x128xf32>
    %c2 = arith.constant 2 : index
    %c0_6 = arith.constant 0 : index
    %c0_7 = arith.constant 0 : index
    %c0_8 = arith.constant 0 : index
    %4 = vector.load %arg1[%c2, %c0_6, %c0_7, %c0_8] : memref<5x1x8x128xf32, #tpu.memory_space<vmem>>, vector<1x1x8x128xf32>
    %5 = vector.shape_cast %4 : vector<1x1x8x128xf32> to vector<8x128xf32>
    %c3 = arith.constant 3 : index
    %c0_9 = arith.constant 0 : index
    %c0_10 = arith.constant 0 : index
    %c0_11 = arith.constant 0 : index
    %6 = vector.load %arg1[%c3, %c0_9, %c0_10, %c0_11] : memref<5x1x8x128xf32, #tpu.memory_space<vmem>>, vector<1x1x8x128xf32>
    %7 = vector.shape_cast %6 : vector<1x1x8x128xf32> to vector<8x128xf32>
    %c4 = arith.constant 4 : index
    %c0_12 = arith.constant 0 : index
    %c0_13 = arith.constant 0 : index
    %c0_14 = arith.constant 0 : index
    %8 = vector.load %arg1[%c4, %c0_12, %c0_13, %c0_14] : memref<5x1x8x128xf32, #tpu.memory_space<vmem>>, vector<1x1x8x128xf32>
    %9 = vector.shape_cast %8 : vector<1x1x8x128xf32> to vector<8x128xf32>
    %c0_15 = arith.constant 0 : index
    %10 = memref.load %arg2[%c0_15] : memref<15xf32, #tpu.memory_space<smem>>
    %11 = vector.broadcast %10 : f32 to vector<8x128xf32>
    %12 = arith.mulf %11, %1 : vector<8x128xf32>
    %c3_16 = arith.constant 3 : index
    %13 = memref.load %arg2[%c3_16] : memref<15xf32, #tpu.memory_space<smem>>
    %14 = vector.broadcast %13 : f32 to vector<8x128xf32>
    %15 = arith.mulf %14, %3 : vector<8x128xf32>
    %16 = arith.addf %12, %15 : vector<8x128xf32>
    %c6 = arith.constant 6 : index
    %17 = memref.load %arg2[%c6] : memref<15xf32, #tpu.memory_space<smem>>
    %18 = vector.broadcast %17 : f32 to vector<8x128xf32>
    %19 = arith.mulf %18, %5 : vector<8x128xf32>
    %20 = arith.addf %16, %19 : vector<8x128xf32>
    %c9 = arith.constant 9 : index
    %21 = memref.load %arg2[%c9] : memref<15xf32, #tpu.memory_space<smem>>
    %22 = vector.broadcast %21 : f32 to vector<8x128xf32>
    %23 = arith.mulf %22, %7 : vector<8x128xf32>
    %24 = arith.addf %20, %23 : vector<8x128xf32>
    %c12 = arith.constant 12 : index
    %25 = memref.load %arg2[%c12] : memref<15xf32, #tpu.memory_space<smem>>
    %26 = vector.broadcast %25 : f32 to vector<8x128xf32>
    %27 = arith.mulf %26, %9 : vector<8x128xf32>
    %28 = arith.addf %24, %27 : vector<8x128xf32>
    %c0_17 = arith.constant 0 : index
    %29 = memref.load %arg3[%c0_17] : memref<3xf32, #tpu.memory_space<smem>>
    %30 = vector.broadcast %29 : f32 to vector<8x128xf32>
    %31 = arith.addf %28, %30 : vector<8x128xf32>
    %32 = arith.negf %31 : vector<8x128xf32>
    %33 = math.exp %32 : vector<8x128xf32>
    %cst = arith.constant 1.000000e+00 : f32
    %34 = vector.broadcast %cst : f32 to vector<8x128xf32>
    %35 = arith.addf %34, %33 : vector<8x128xf32>
    %36 = arith.divf %34, %35 : vector<8x128xf32>
    %c0_18 = arith.constant 0 : index
    %37 = memref.load %arg4[%c0_18] : memref<3xf32, #tpu.memory_space<smem>>
    %38 = vector.broadcast %37 : f32 to vector<8x128xf32>
    %39 = arith.mulf %38, %36 : vector<8x128xf32>
    %c1_19 = arith.constant 1 : index
    %40 = memref.load %arg2[%c1_19] : memref<15xf32, #tpu.memory_space<smem>>
    %41 = vector.broadcast %40 : f32 to vector<8x128xf32>
    %42 = arith.mulf %41, %1 : vector<8x128xf32>
    %c4_20 = arith.constant 4 : index
    %43 = memref.load %arg2[%c4_20] : memref<15xf32, #tpu.memory_space<smem>>
    %44 = vector.broadcast %43 : f32 to vector<8x128xf32>
    %45 = arith.mulf %44, %3 : vector<8x128xf32>
    %46 = arith.addf %42, %45 : vector<8x128xf32>
    %c7 = arith.constant 7 : index
    %47 = memref.load %arg2[%c7] : memref<15xf32, #tpu.memory_space<smem>>
    %48 = vector.broadcast %47 : f32 to vector<8x128xf32>
    %49 = arith.mulf %48, %5 : vector<8x128xf32>
    %50 = arith.addf %46, %49 : vector<8x128xf32>
    %c10 = arith.constant 10 : index
    %51 = memref.load %arg2[%c10] : memref<15xf32, #tpu.memory_space<smem>>
    %52 = vector.broadcast %51 : f32 to vector<8x128xf32>
    %53 = arith.mulf %52, %7 : vector<8x128xf32>
    %54 = arith.addf %50, %53 : vector<8x128xf32>
    %c13 = arith.constant 13 : index
    %55 = memref.load %arg2[%c13] : memref<15xf32, #tpu.memory_space<smem>>
    %56 = vector.broadcast %55 : f32 to vector<8x128xf32>
    %57 = arith.mulf %56, %9 : vector<8x128xf32>
    %58 = arith.addf %54, %57 : vector<8x128xf32>
    %c1_21 = arith.constant 1 : index
    %59 = memref.load %arg3[%c1_21] : memref<3xf32, #tpu.memory_space<smem>>
    %60 = vector.broadcast %59 : f32 to vector<8x128xf32>
    %61 = arith.addf %58, %60 : vector<8x128xf32>
    %62 = arith.negf %61 : vector<8x128xf32>
    %63 = math.exp %62 : vector<8x128xf32>
    %cst_22 = arith.constant 1.000000e+00 : f32
    %64 = vector.broadcast %cst_22 : f32 to vector<8x128xf32>
    %65 = arith.addf %64, %63 : vector<8x128xf32>
    %66 = arith.divf %64, %65 : vector<8x128xf32>
    %c1_23 = arith.constant 1 : index
    %67 = memref.load %arg4[%c1_23] : memref<3xf32, #tpu.memory_space<smem>>
    %68 = vector.broadcast %67 : f32 to vector<8x128xf32>
    %69 = arith.mulf %68, %66 : vector<8x128xf32>
    %70 = arith.addf %39, %69 : vector<8x128xf32>
    %c2_24 = arith.constant 2 : index
    %71 = memref.load %arg2[%c2_24] : memref<15xf32, #tpu.memory_space<smem>>
    %72 = vector.broadcast %71 : f32 to vector<8x128xf32>
    %73 = arith.mulf %72, %1 : vector<8x128xf32>
    %c5 = arith.constant 5 : index
    %74 = memref.load %arg2[%c5] : memref<15xf32, #tpu.memory_space<smem>>
    %75 = vector.broadcast %74 : f32 to vector<8x128xf32>
    %76 = arith.mulf %75, %3 : vector<8x128xf32>
    %77 = arith.addf %73, %76 : vector<8x128xf32>
    %c8 = arith.constant 8 : index
    %78 = memref.load %arg2[%c8] : memref<15xf32, #tpu.memory_space<smem>>
    %79 = vector.broadcast %78 : f32 to vector<8x128xf32>
    %80 = arith.mulf %79, %5 : vector<8x128xf32>
    %81 = arith.addf %77, %80 : vector<8x128xf32>
    %c11 = arith.constant 11 : index
    %82 = memref.load %arg2[%c11] : memref<15xf32, #tpu.memory_space<smem>>
    %83 = vector.broadcast %82 : f32 to vector<8x128xf32>
    %84 = arith.mulf %83, %7 : vector<8x128xf32>
    %85 = arith.addf %81, %84 : vector<8x128xf32>
    %c14 = arith.constant 14 : index
    %86 = memref.load %arg2[%c14] : memref<15xf32, #tpu.memory_space<smem>>
    %87 = vector.broadcast %86 : f32 to vector<8x128xf32>
    %88 = arith.mulf %87, %9 : vector<8x128xf32>
    %89 = arith.addf %85, %88 : vector<8x128xf32>
    %c2_25 = arith.constant 2 : index
    %90 = memref.load %arg3[%c2_25] : memref<3xf32, #tpu.memory_space<smem>>
    %91 = vector.broadcast %90 : f32 to vector<8x128xf32>
    %92 = arith.addf %89, %91 : vector<8x128xf32>
    %93 = arith.negf %92 : vector<8x128xf32>
    %94 = math.exp %93 : vector<8x128xf32>
    %cst_26 = arith.constant 1.000000e+00 : f32
    %95 = vector.broadcast %cst_26 : f32 to vector<8x128xf32>
    %96 = arith.addf %95, %94 : vector<8x128xf32>
    %97 = arith.divf %95, %96 : vector<8x128xf32>
    %c2_27 = arith.constant 2 : index
    %98 = memref.load %arg4[%c2_27] : memref<3xf32, #tpu.memory_space<smem>>
    %99 = vector.broadcast %98 : f32 to vector<8x128xf32>
    %100 = arith.mulf %99, %97 : vector<8x128xf32>
    %101 = arith.addf %70, %100 : vector<8x128xf32>
    %c0_28 = arith.constant 0 : index
    %102 = memref.load %arg5[%c0_28] : memref<1xf32, #tpu.memory_space<smem>>
    %103 = vector.broadcast %102 : f32 to vector<8x128xf32>
    %104 = arith.addf %101, %103 : vector<8x128xf32>
    %105 = arith.negf %104 : vector<8x128xf32>
    %106 = math.exp %105 : vector<8x128xf32>
    %cst_29 = arith.constant 1.000000e+00 : f32
    %107 = vector.broadcast %cst_29 : f32 to vector<8x128xf32>
    %108 = arith.addf %107, %106 : vector<8x128xf32>
    %109 = arith.divf %107, %108 : vector<8x128xf32>
    %c0_30 = arith.constant 0 : index
    %c0_31 = arith.constant 0 : index
    %c0_32 = arith.constant 0 : index
    %110 = vector.load %arg6[%c0_30, %c0_31, %c0_32] : memref<1x8x128xf32, #tpu.memory_space<vmem>>, vector<1x8x128xf32>
    %111 = vector.shape_cast %110 : vector<1x8x128xf32> to vector<8x128xf32>
    %112 = vector.shape_cast %109 : vector<8x128xf32> to vector<1x8x128xf32>
    tpu.vector_store %arg6[%c0_30, %c0_31, %c0_32], %112 {strides = array<i32>} : memref<1x8x128xf32, #tpu.memory_space<vmem>>, vector<1x8x128xf32>,
    return
  }
  func.func @transform_0(%arg0: i32) -> (i32, i32, i32, i32) {
    %c0_i32 = arith.constant 0 : i32
    %c0_i32_0 = arith.constant 0 : i32
    %c0_i32_1 = arith.constant 0 : i32
    %c0_i32_2 = arith.constant 0 : i32
    return %c0_i32, %arg0, %c0_i32_0, %c0_i32_1 : i32, i32, i32, i32
  }
  func.func @transform_1(%arg0: i32) -> i32 {
    %c0_i32 = arith.constant 0 : i32
    %c0_i32_0 = arith.constant 0 : i32
    return %c0_i32 : i32
  }
  func.func @transform_2(%arg0: i32) -> i32 {
    %c0_i32 = arith.constant 0 : i32
    %c0_i32_0 = arith.constant 0 : i32
    return %c0_i32 : i32
  }
  func.func @transform_3(%arg0: i32) -> i32 {
    %c0_i32 = arith.constant 0 : i32
    %c0_i32_0 = arith.constant 0 : i32
    return %c0_i32 : i32
  }
  func.func @transform_4(%arg0: i32) -> i32 {
    %c0_i32 = arith.constant 0 : i32
    %c0_i32_0 = arith.constant 0 : i32
    return %c0_i32 : i32
  }
  func.func @transform_5(%arg0: i32) -> (i32, i32, i32) {
    %c0_i32 = arith.constant 0 : i32
    %c0_i32_0 = arith.constant 0 : i32
    %c0_i32_1 = arith.constant 0 : i32
    return %arg0, %c0_i32, %c0_i32_0 : i32, i32, i32
  }
}

</mosaic_0001>

<llo_original>
// kernel: tpu_custom_call.1
$region0: #{tpu_custom_call.1}
  #allocation0 [shape = 'u32[]', space=smem, size = 0x4, offset = 0x4, fixed_abs, tag = 'smem constant byte address 0x4 - core index']
  #allocation1 [shape = 'u32[144,128]{1,0:T(1,128)}', space=vmem, size = 0x12000, scoped, tag = 'internal scratch']
  #allocation2 [shape = 'f32[1]{0:T(128)S(6)}', space=smem, size = 0x200, scoped, tag = 'scoped memory for tpu_custom_call.1']
  %s0 = inlined_call_operand.hbm [shape: f32[5,1,8,128], index: 0, kind: input, shape index: {}]
  %s1 = inlined_call_operand.vmem [shape: f32[15], index: 1, kind: input, shape index: {}]
  %s2 = inlined_call_operand.vmem [shape: f32[3], index: 2, kind: input, shape index: {}]
  %s3 = inlined_call_operand.vmem [shape: f32[3], index: 3, kind: input, shape index: {}]
  %s4 = inlined_call_operand.<no memory space> [shape: f32[1], index: 4, kind: input, shape index: {}]
  %s5 = inlined_call_operand.hbm [shape: f32[1,8,128], index: 5, kind: output, shape index: {}]
  %s6 = sld [smem:[#allocation0]]
  $region46: #{tpu_custom_call.1} parent=0
    _
  %s8 = ssub.s32 1, %s6
  %s9 = scalar_select 0, %s8, %s6
  %10 = sst [smem:[#allocation2]] %s4
  $region1: #{tpu_custom_call.1} parent=0
    #allocation3 [shape = 'u8[20480]{0}', space=vmem, size = 0x5000, scoped, tag = 'input window, operand 0, single buffered']
    #allocation4 [shape = 's32[1]{0}', space=sflag, size = 0x4, scoped, tag = 'scoped memory for tpu_custom_call.1']
    #allocation5 [shape = 's32[1]{0}', space=sflag, size = 0x4, scoped, tag = 'scoped memory for tpu_custom_call.1']
    #allocation6 [shape = 's32[1]{0}', space=sflag, size = 0x4, scoped, tag = 'scoped memory for tpu_custom_call.1']
    #allocation7 [shape = 'u8[512]{0}', space=smem, size = 0x200, scoped, tag = 'input window, operand 1, single buffered']
    #allocation8 [shape = 'u8[512]{0}', space=smem, size = 0x200, scoped, tag = 'input window, operand 2, single buffered']
    #allocation9 [shape = 's32[1]{0}', space=sflag, size = 0x4, scoped, tag = 'scoped memory for tpu_custom_call.1']
    #allocation10 [shape = 'u8[512]{0}', space=smem, size = 0x200, scoped, tag = 'input window, operand 3, single buffered']
    #allocation11 [shape = 'u8[4096]{0}', space=vmem, size = 0x1000, scoped, tag = 'output window, operand 0, single buffered']
    %11 = vsyncpa [#allocation4], 0
    %12 = vsyncpa [#allocation6], 0
    %13 = vsyncpa [#allocation9], 0
    %14 = vsyncpa [#allocation5], 0
    // Predicated region
    $region2: #{tpu_custom_call.1} parent=1 // pred_check
      _
    $region3: #{tpu_custom_call.1} parent=1 // pred_check_branch
      %16 = sbr.rel (0) target = $region5
    $region4: #{tpu_custom_call.1} parent=1 // pred_region
      %s18 = ssub.s32 640, 640
      %19 = vsyncadd [#allocation4], %s18
      %s20 = sshll.u32 [#allocation3], 4
      %s21 = int_to_ptr.vmem [resolvable:$true] %s20
      %26 = dma.hbm_to_vmem [thread:$0]  %s0, 640, %s21, [#allocation4], 128, 128, 8
    $region5: #{tpu_custom_call.1} parent=1 // pred_fallthru
      _
    // Predicated region
    $region6: #{tpu_custom_call.1} parent=1 // pred_check
      _
    $region7: #{tpu_custom_call.1} parent=1 // pred_check_branch
      %28 = sbr.rel (0) target = $region9
    $region8: #{tpu_custom_call.1} parent=1 // pred_region
      %s30 = ssub.s32 16, 16
      %31 = vsyncadd [#allocation6], %s30
      %s33 = sshll.u32 %s1, 4
      %s34 = int_to_ptr.vmem [resolvable:$true] %s33
      %36 = dma.vmem_to_smem %s34, 16, [#allocation7], [#allocation6]
    $region9: #{tpu_custom_call.1} parent=1 // pred_fallthru
      _
    // Predicated region
    $region10: #{tpu_custom_call.1} parent=1 // pred_check
      _
    $region11: #{tpu_custom_call.1} parent=1 // pred_check_branch
      %38 = sbr.rel (0) target = $region13
    $region12: #{tpu_custom_call.1} parent=1 // pred_region
      %s40 = ssub.s32 16, 16
      %41 = vsyncadd [#allocation9], %s40
      %s43 = sshll.u32 %s2, 4
      %s44 = int_to_ptr.vmem [resolvable:$true] %s43
      %46 = dma.vmem_to_smem %s44, 16, [#allocation8], [#allocation9]
    $region13: #{tpu_custom_call.1} parent=1 // pred_fallthru
      _
    // Predicated region
    $region14: #{tpu_custom_call.1} parent=1 // pred_check
      _
    $region15: #{tpu_custom_call.1} parent=1 // pred_check_branch
      %48 = sbr.rel (0) target = $region17
    $region16: #{tpu_custom_call.1} parent=1 // pred_region
      %s50 = ssub.s32 16, 16
      %51 = vsyncadd [#allocation9], %s50
      %s53 = sshll.u32 %s3, 4
      %s54 = int_to_ptr.vmem [resolvable:$true] %s53
      %56 = dma.vmem_to_smem %s54, 16, [#allocation10], [#allocation9]
    $region17: #{tpu_custom_call.1} parent=1 // pred_fallthru
      _
    // Predicated region
    $region18: #{tpu_custom_call.1} parent=1 // pred_check
      _
    $region19: #{tpu_custom_call.1} parent=1 // pred_check_branch
      %58 = sbr.rel (0) target = $region21
    $region20: #{tpu_custom_call.1} parent=1 // pred_region
      _
    $region21: #{tpu_custom_call.1} parent=1 // pred_fallthru
      _
    // Predicated region
    $region22: #{tpu_custom_call.1} parent=1 // pred_check
      _
    $region23: #{tpu_custom_call.1} parent=1 // pred_check_branch
      %60 = sbr.rel (0) target = $region25
    $region24: #{tpu_custom_call.1} parent=1 // pred_region
      %61 = dma.done [#allocation4], 640
    $region25: #{tpu_custom_call.1} parent=1 // pred_fallthru
      _
    // Predicated region
    $region26: #{tpu_custom_call.1} parent=1 // pred_check
      _
    $region27: #{tpu_custom_call.1} parent=1 // pred_check_branch
      %63 = sbr.rel (0) target = $region29
    $region28: #{tpu_custom_call.1} parent=1 // pred_region
      %64 = dma.done [#allocation6], 16
    $region29: #{tpu_custom_call.1} parent=1 // pred_fallthru
      _
    // Predicated region
    $region30: #{tpu_custom_call.1} parent=1 // pred_check
      _
    $region31: #{tpu_custom_call.1} parent=1 // pred_check_branch
      %66 = sbr.rel (0) target = $region33
    $region32: #{tpu_custom_call.1} parent=1 // pred_region
      %67 = dma.done [#allocation9], 16
    $region33: #{tpu_custom_call.1} parent=1 // pred_fallthru
      _
    // Predicated region
    $region34: #{tpu_custom_call.1} parent=1 // pred_check
      _
    $region35: #{tpu_custom_call.1} parent=1 // pred_check_branch
      %69 = sbr.rel (0) target = $region37
    $region36: #{tpu_custom_call.1} parent=1 // pred_region
      %70 = dma.done [#allocation9], 16
    $region37: #{tpu_custom_call.1} parent=1 // pred_fallthru
      _
    %71 = sfence
    %v72 = vld [vmem:[#allocation3] sm:$0xff]
    %s73 = scalar_lea.vmem [#allocation3], 8
    %v74 = vld [vmem:[%s73] sm:$0xff]
    %s75 = scalar_lea.vmem [#allocation3], 16
    %v76 = vld [vmem:[%s75] sm:$0xff]
    %s77 = scalar_lea.vmem [#allocation3], 24
    %v78 = vld [vmem:[%s77] sm:$0xff]
    %s79 = scalar_lea.vmem [#allocation3], 32
    %v80 = vld [vmem:[%s79] sm:$0xff]
    %s81 = sld [smem:[#allocation7]]
    %v82 = vstv %s81
    %v83 = vmul.f32 %v82, %v72
    %s84 = sld [smem:[#allocation7 + $0x3]]
    %v85 = vstv %s84
    %v86 = vmul.f32 %v85, %v74
    %v87 = vadd.f32 %v83, %v86
    %s88 = sld [smem:[#allocation7 + $0x6]]
    %v89 = vstv %s88
    %v90 = vmul.f32 %v89, %v76
    %v91 = vadd.f32 %v87, %v90
    %s92 = sld [smem:[#allocation7 + $0x9]]
    %v93 = vstv %s92
    %v94 = vmul.f32 %v93, %v78
    %v95 = vadd.f32 %v91, %v94
    %s96 = sld [smem:[#allocation7 + $0xc]]
    %v97 = vstv %s96
    %v98 = vmul.f32 %v97, %v80
    %v99 = vadd.f32 %v95, %v98
    %s100 = sld [smem:[#allocation8]]
    %v101 = vstv %s100
    %v102 = vadd.f32 %v99, %v101
    %v103 = vxor.u32 %v102, 2147483648
    %v104 = vmul.f32 %v103, 1.442695
    %v105 = vpow.pop %v104
    %v106 = vadd.f32 %v105, 1.0
    %v107 = vrcp.pop %v106
    %v108 = vmul.f32 1.0, %v107
    %s109 = sld [smem:[#allocation10]]
    %v110 = vstv %s109
    %v111 = vmul.f32 %v110, %v108
    %s112 = sld [smem:[#allocation7 + $0x1]]
    %v113 = vstv %s112
    %v114 = vmul.f32 %v113, %v72
    %s115 = sld [smem:[#allocation7 + $0x4]]
    %v116 = vstv %s115
    %v117 = vmul.f32 %v116, %v74
    %v118 = vadd.f32 %v114, %v117
    %s119 = sld [smem:[#allocation7 + $0x7]]
    %v120 = vstv %s119
    %v121 = vmul.f32 %v120, %v76
    %v122 = vadd.f32 %v118, %v121
    %s123 = sld [smem:[#allocation7 + $0xa]]
    %v124 = vstv %s123
    %v125 = vmul.f32 %v124, %v78
    %v126 = vadd.f32 %v122, %v125
    %s127 = sld [smem:[#allocation7 + $0xd]]
    %v128 = vstv %s127
    %v129 = vmul.f32 %v128, %v80
    %v130 = vadd.f32 %v126, %v129
    %s131 = sld [smem:[#allocation8 + $0x1]]
    %v132 = vstv %s131
    %v133 = vadd.f32 %v130, %v132
    %v134 = vxor.u32 %v133, 2147483648
    %v135 = vmul.f32 %v134, 1.442695
    %v136 = vpow.pop %v135
    %v137 = vadd.f32 %v136, 1.0
    %v138 = vrcp.pop %v137
    %v139 = vmul.f32 1.0, %v138
    %s140 = sld [smem:[#allocation10 + $0x1]]
    %v141 = vstv %s140
    %v142 = vmul.f32 %v141, %v139
    %v143 = vadd.f32 %v111, %v142
    %s144 = sld [smem:[#allocation7 + $0x2]]
    %v145 = vstv %s144
    %v146 = vmul.f32 %v145, %v72
    %s147 = sld [smem:[#allocation7 + $0x5]]
    %v148 = vstv %s147
    %v149 = vmul.f32 %v148, %v74
    %v150 = vadd.f32 %v146, %v149
    %s151 = sld [smem:[#allocation7 + $0x8]]
    %v152 = vstv %s151
    %v153 = vmul.f32 %v152, %v76
    %v154 = vadd.f32 %v150, %v153
    %s155 = sld [smem:[#allocation7 + $0xb]]
    %v156 = vstv %s155
    %v157 = vmul.f32 %v156, %v78
    %v158 = vadd.f32 %v154, %v157
    %s159 = sld [smem:[#allocation7 + $0xe]]
    %v160 = vstv %s159
    %v161 = vmul.f32 %v160, %v80
    %v162 = vadd.f32 %v158, %v161
    %s163 = sld [smem:[#allocation8 + $0x2]]
    %v164 = vstv %s163
    %v165 = vadd.f32 %v162, %v164
    %v166 = vxor.u32 %v165, 2147483648
    %v167 = vmul.f32 %v166, 1.442695
    %v168 = vpow.pop %v167
    %v169 = vadd.f32 %v168, 1.0
    %v170 = vrcp.pop %v169
    %v171 = vmul.f32 1.0, %v170
    %s172 = sld [smem:[#allocation10 + $0x2]]
    %v173 = vstv %s172
    %v174 = vmul.f32 %v173, %v171
    %v175 = vadd.f32 %v143, %v174
    %s176 = sld [smem:[#allocation2]]
    %v177 = vstv %s176
    %v178 = vadd.f32 %v175, %v177
    %v179 = vxor.u32 %v178, 2147483648
    %v180 = vmul.f32 %v179, 1.442695
    %v181 = vpow.pop %v180
    %v182 = vadd.f32 %v181, 1.0
    %v183 = vrcp.pop %v182
    %v184 = vmul.f32 1.0, %v183
    %185 = vst [vmem:[#allocation11] sm:$0xff] %v184
    // Predicated region
    $region38: #{tpu_custom_call.1} parent=1 // pred_check
      _
    $region39: #{tpu_custom_call.1} parent=1 // pred_check_branch
      %187 = sbr.rel (0) target = $region41
    $region40: #{tpu_custom_call.1} parent=1 // pred_region
      %s189 = ssub.s32 128, 128
      %190 = vsyncadd [#allocation5], %s189
      %s192 = sshll.u32 [#allocation11], 4
      %s193 = int_to_ptr.vmem [resolvable:$true] %s192
      %195 = dma.vmem_to_hbm [thread:$0]  %s193, 128, %s5, [#allocation5]
    $region41: #{tpu_custom_call.1} parent=1 // pred_fallthru
      _
    // Predicated region
    $region42: #{tpu_custom_call.1} parent=1 // pred_check
      _
    $region43: #{tpu_custom_call.1} parent=1 // pred_check_branch
      %197 = sbr.rel (0) target = $region45
    $region44: #{tpu_custom_call.1} parent=1 // pred_region
      %198 = dma.done [#allocation5], 128
    $region45: #{tpu_custom_call.1} parent=1 // pred_fallthru
      _
    %199 = vsyncpa [#allocation4], 1
    %200 = vsyncpa [#allocation5], 1
    %201 = vsyncpa [#allocation6], 1
    %202 = vsyncpa [#allocation9], 1

</llo_original>
